<compile_context>
chip_gen: v7x
topology: tpu7x:2x2x1
jax: 0.10.0
libtpu: 0.0.40
codegen_flags: <defaults>
</compile_context>

<pallas_src>
import jax
import jax.numpy as jnp
from jax.experimental import pallas as pl
from jax.experimental.pallas import tpu as pltpu

_EPS = 1e-8              # matches torch cosine-similarity eps default
_EPS2 = _EPS * _EPS


def _round_up(x, m):
    return ((x + m - 1) // m) * m


def _sublane(dtype):
    # minimum second-to-last tile dim per dtype packing (f32:8, bf16:16, int8/fp8:32)
    return {4: 8, 2: 16, 1: 32}.get(jnp.dtype(dtype).itemsize, 8)


# ----------------------------------------------------------------------------
# Aux kernel 1: inverse Frobenius norm per ROW of x1, D tiled (output (R, 1)).
# ----------------------------------------------------------------------------
def _row_inv_norm_kernel(x_ref, o_ref, ssq_ref):
    k = pl.program_id(1)

    @pl.when(k == 0)
    def _():
        ssq_ref[...] = jnp.zeros_like(ssq_ref)

    x = x_ref[...].astype(jnp.float32)                       # (tr, tkd)
    ssq_ref[...] += jnp.sum(x * x, axis=1, keepdims=True)    # (tr, 1)

    @pl.when(k == pl.num_programs(1) - 1)
    def _():
        # EUP rsqrt; eps clamp -> zero rows give finite inv-norm (result is 0, not NaN)
        o_ref[...] = jax.lax.rsqrt(jnp.maximum(ssq_ref[...], _EPS2))


def _row_inv_norms(x, tr, tkd):
    R, D = x.shape
    return pl.pallas_call(
        _row_inv_norm_kernel,
        out_shape=jax.ShapeDtypeStruct((R, 1), jnp.float32),
        grid_spec=pltpu.PrefetchScalarGridSpec(
            num_scalar_prefetch=0,
            grid=(R // tr, D // tkd),
            in_specs=[pl.BlockSpec((tr, tkd), lambda i, k: (i, k))],
            out_specs=pl.BlockSpec((tr, 1), lambda i, k: (i, 0)),
            scratch_shapes=[pltpu.VMEM((tr, 1), jnp.float32)],
        ),
        compiler_params=pltpu.CompilerParams(
            dimension_semantics=("parallel", "arbitrary")),
    )(x)


# ----------------------------------------------------------------------------
# Aux kernel 2: inverse norm per COLUMN of x2.T (= rows of x2), D tiled,
# emitted directly as a lane-dense (1, N) row (no relayout needed downstream).
# ----------------------------------------------------------------------------
def _col_inv_norm_kernel(xt_ref, o_ref, ssq_ref):
    k = pl.program_id(1)

    @pl.when(k == 0)
    def _():
        ssq_ref[...] = jnp.zeros_like(ssq_ref)

    x = xt_ref[...].astype(jnp.float32)                      # (tkd, tc)
    ssq_ref[...] += jnp.sum(x * x, axis=0, keepdims=True)    # (1, tc)

    @pl.when(k == pl.num_programs(1) - 1)
    def _():
        o_ref[...] = jax.lax.rsqrt(jnp.maximum(ssq_ref[...], _EPS2))


def _col_inv_norms(xt, tc, tkd):
    D, C = xt.shape
    return pl.pallas_call(
        _col_inv_norm_kernel,
        out_shape=jax.ShapeDtypeStruct((1, C), jnp.float32),
        grid_spec=pltpu.PrefetchScalarGridSpec(
            num_scalar_prefetch=0,
            grid=(C // tc, D // tkd),
            in_specs=[pl.BlockSpec((tkd, tc), lambda j, k: (k, j))],
            out_specs=pl.BlockSpec((1, tc), lambda j, k: (0, j)),
            scratch_shapes=[pltpu.VMEM((1, tc), jnp.float32)],
        ),
        compiler_params=pltpu.CompilerParams(
            dimension_semantics=("parallel", "arbitrary")),
    )(xt)


# ----------------------------------------------------------------------------
# Main kernel: tiled x1 @ x2t (canonical MXU feed), f32 VMEM accumulator,
# normalize with the precomputed inverse norms at finalize (2 broadcast muls).
# ----------------------------------------------------------------------------
def _cosine_matmul_kernel(x1_ref, x2t_ref, inv1_ref, inv2_ref, o_ref, acc_ref):
    k = pl.program_id(2)

    @pl.when(k == 0)
    def _():
        acc_ref[...] = jnp.zeros_like(acc_ref)

    acc_ref[...] += jnp.dot(x1_ref[...], x2t_ref[...],
                            preferred_element_type=jnp.float32)

    @pl.when(k == pl.num_programs(2) - 1)
    def _():
        o_ref[...] = (acc_ref[...] * inv1_ref[...] * inv2_ref[...]).astype(o_ref.dtype)


def cosine_similarity(x1, x2, *, tm_max=512, tn_max=512, tk_max=512,
                      matmul_dtype=None):
    """Pairwise cosine similarity matrix (M, N) = normalize(x1 @ x2.T)."""
    M, D = x1.shape
    N, D2 = x2.shape
    assert D == D2, "feature dims must match"

    mm_dtype = jnp.dtype(matmul_dtype) if matmul_dtype is not None else x1.dtype
    sub = _sublane(mm_dtype)

    # 8/16/128-aligned tile sizes; zero padding changes neither the dot products
    # nor the sums of squares, and padded rows/cols are sliced off at the end.
    tm = min(tm_max, _round_up(M, sub))
    tn = min(tn_max, _round_up(N, 128))      # lane-dense output tiles
    tk = min(tk_max, _round_up(D, 128))

    # v7x has 2 TensorCores sharded over "parallel" grid axes: avoid a degenerate
    # 1x1 output grid by splitting M when both parallel extents would be 1.
    if _round_up(M, tm) // tm == 1 and _round_up(N, tn) // tn == 1:
        tm_half = _round_up(max(sub, (M + 1) // 2), sub)
        tm = min(tm, tm_half)

    Mp, Np, Dp = _round_up(M, tm), _round_up(N, tn), _round_up(D, tk)

    x1p = jnp.pad(x1, ((0, Mp - M), (0, Dp - D)))
    x2tp = jnp.pad(x2.T, ((0, Dp - D), (0, Np - N)))   # (Dp, Np): canonical MXU rhs

    if matmul_dtype is not None:
        x1p = x1p.astype(mm_dtype)
        x2tp = x2tp.astype(mm_dtype)

    # Inverse norms hoisted out of the (i, j, k) tile loop; D is tiled so the aux
    # kernels stay VMEM-flat for any feature dim (v7x 64 MiB safe).
    inv1 = _row_inv_norms(x1p, tm, tk)       # (Mp, 1)
    inv2 = _col_inv_norms(x2tp, tn, tk)      # (1, Np), lane-dense

    grid = (Mp // tm, Np // tn, Dp // tk)
    itemsize = jnp.dtype(x1p.dtype).itemsize
    cost = pl.CostEstimate(
        flops=2 * Mp * Np * Dp,
        transcendentals=0,
        bytes_accessed=itemsize * (Mp * Dp + Np * Dp) + 4 * Mp * Np,
    )

    out = pl.pallas_call(
        _cosine_matmul_kernel,
        out_shape=jax.ShapeDtypeStruct((Mp, Np), jnp.float32),
        grid_spec=pltpu.PrefetchScalarGridSpec(
            num_scalar_prefetch=0,
            grid=grid,
            in_specs=[
                pl.BlockSpec((tm, tk), lambda i, j, k: (i, k)),   # x1 tile
                pl.BlockSpec((tk, tn), lambda i, j, k: (k, j)),   # x2.T tile
                pl.BlockSpec((tm, 1), lambda i, j, k: (i, 0)),    # inv norms of x1 rows
                pl.BlockSpec((1, tn), lambda i, j, k: (0, j)),    # inv norms of x2 rows
            ],
            out_specs=pl.BlockSpec((tm, tn), lambda i, j, k: (i, j)),
            scratch_shapes=[pltpu.VMEM((tm, tn), jnp.float32)],
        ),
        compiler_params=pltpu.CompilerParams(
            dimension_semantics=("parallel", "parallel", "arbitrary")),
        cost_estimate=cost,
    )(x1p, x2tp, inv1, inv2)

    if Mp == M and Np == N:
        return out                       # skip the extra HBM round-trip when aligned
    return out[:M, :N]


def _reference(x1, x2):
    dots = x1 @ x2.T
    n1 = jnp.linalg.norm(x1, axis=1, keepdims=True)
    n2 = jnp.linalg.norm(x2, axis=1, keepdims=True)
    return dots / (n1 @ n2.T)


if __name__ == "__main__":
    key = jax.random.PRNGKey(0)
    k1, k2 = jax.random.split(key)
    M, N, D = 16, 8, 32
    x1 = jax.random.normal(k1, (M, D), dtype=jnp.float32)
    x2 = jax.random.normal(k2, (N, D), dtype=jnp.float32)

    out = cosine_similarity(x1, x2)
    jax.block_until_ready(out)

    ref = _reference(x1, x2)
    assert out.shape == (M, N)
    assert jnp.allclose(out, ref, atol=1e-4, rtol=1e-4), "mismatch vs reference"
    print("KERNEL_OK")
</pallas_src>

<mosaic_0001>
module attributes {stable_mosaic.version = 11 : i64} {
  func.func @_row_inv_norm_kernel(%arg0: i32, %arg1: i32, %arg2: memref<8x128xf32, #tpu.memory_space<vmem>>, %arg3: memref<8x1xf32, #tpu.memory_space<vmem>>, %arg4: memref<8x1xf32, #tpu.memory_space<vmem>>) attributes {dimension_semantics = [#tpu.dimension_semantics<parallel>, #tpu.dimension_semantics<arbitrary>], iteration_bounds = array<i64: 2, 1>, scalar_prefetch = 0 : i64, scratch_operands = 1 : i64, tpu.core_type = #tpu.core_type<tc>, window_params = [{transform_indices = @transform_0, window_bounds = array<i64: 8, 128>}, {transform_indices = @transform_1, window_bounds = array<i64: 8, 1>}]} {
    %c0_i32 = arith.constant 0 : i32
    %0 = arith.cmpi eq, %arg1, %c0_i32 : i32
    %1 = arith.extui %0 : i1 to i32
    %c0_i32_0 = arith.constant 0 : i32
    %2 = arith.cmpi ne, %1, %c0_i32_0 : i32
    scf.if %2 {
      %cst_8 = arith.constant 0.000000e+00 : f32
      %13 = vector.broadcast %cst_8 : f32 to vector<8x1xf32>
      %c0_9 = arith.constant 0 : index
      %c0_10 = arith.constant 0 : index
      %14 = vector.load %arg4[%c0_9, %c0_10] : memref<8x1xf32, #tpu.memory_space<vmem>>, vector<8x1xf32>
      tpu.vector_store %arg4[%c0_9, %c0_10], %13 {strides = array<i32>} : memref<8x1xf32, #tpu.memory_space<vmem>>, vector<8x1xf32>,
    } else {
    }
    %c0 = arith.constant 0 : index
    %c0_1 = arith.constant 0 : index
    %3 = vector.load %arg2[%c0, %c0_1] : memref<8x128xf32, #tpu.memory_space<vmem>>, vector<8x128xf32>
    %c0_2 = arith.constant 0 : index
    %c0_3 = arith.constant 0 : index
    %4 = vector.load %arg4[%c0_2, %c0_3] : memref<8x1xf32, #tpu.memory_space<vmem>>, vector<8x1xf32>
    %5 = arith.mulf %3, %3 : vector<8x128xf32>
    %cst = arith.constant dense<0.000000e+00> : vector<8xf32>
    %6 = vector.multi_reduction <add>, %5, %cst [1] : vector<8x128xf32> to vector<8xf32>
    %7 = vector.shape_cast %6 : vector<8xf32> to vector<8x1xf32>
    %8 = arith.addf %4, %7 : vector<8x1xf32>
    %c0_4 = arith.constant 0 : index
    %c0_5 = arith.constant 0 : index
    %9 = vector.load %arg4[%c0_4, %c0_5] : memref<8x1xf32, #tpu.memory_space<vmem>>, vector<8x1xf32>
    tpu.vector_store %arg4[%c0_4, %c0_5], %8 {strides = array<i32>} : memref<8x1xf32, #tpu.memory_space<vmem>>, vector<8x1xf32>,
    %c0_i32_6 = arith.constant 0 : i32
    %10 = arith.cmpi eq, %arg1, %c0_i32_6 : i32
    %11 = arith.extui %10 : i1 to i32
    %c0_i32_7 = arith.constant 0 : i32
    %12 = arith.cmpi ne, %11, %c0_i32_7 : i32
    scf.if %12 {
      %c0_8 = arith.constant 0 : index
      %c0_9 = arith.constant 0 : index
      %13 = vector.load %arg4[%c0_8, %c0_9] : memref<8x1xf32, #tpu.memory_space<vmem>>, vector<8x1xf32>
      %cst_10 = arith.constant 1.000000e-16 : f32
      %14 = vector.broadcast %cst_10 : f32 to vector<8x1xf32>
      %15 = arith.maximumf %13, %14 : vector<8x1xf32>
      %16 = math.rsqrt %15 : vector<8x1xf32>
      %c0_11 = arith.constant 0 : index
      %c0_12 = arith.constant 0 : index
      %17 = vector.load %arg3[%c0_11, %c0_12] : memref<8x1xf32, #tpu.memory_space<vmem>>, vector<8x1xf32>
      tpu.vector_store %arg3[%c0_11, %c0_12], %16 {strides = array<i32>} : memref<8x1xf32, #tpu.memory_space<vmem>>, vector<8x1xf32>,
    } else {
    }
    return
  }
  func.func @transform_0(%arg0: i32, %arg1: i32) -> (i32, i32) {
    %c0_i32 = arith.constant 0 : i32
    return %arg0, %arg1 : i32, i32
  }
  func.func @transform_1(%arg0: i32, %arg1: i32) -> (i32, i32) {
    %c0_i32 = arith.constant 0 : i32
    %c0_i32_0 = arith.constant 0 : i32
    return %arg0, %c0_i32 : i32, i32
  }
}

</mosaic_0001>

<llo_original>
// kernel: tpu_custom_call.1
$region0: #{tpu_custom_call.1}
  #allocation0 [shape = 'u32[]', space=smem, size = 0x4, offset = 0x4, fixed_abs, tag = 'smem constant byte address 0x4 - core index']
  #allocation1 [shape = 'u32[144,128]{1,0:T(1,128)}', space=vmem, size = 0x12000, scoped, tag = 'internal scratch']
  #allocation2 [shape = 'f32[8,1]{1,0:T(8,128)}', space=vmem, size = 0x1000, scoped, tag = 'scratch operand']
  %s0 = inlined_call_operand.hbm [shape: f32[16,128], index: 0, kind: input, shape index: {}]
  %s1 = inlined_call_operand.vmem [shape: f32[16,1], index: 1, kind: output, shape index: {}]
  %s2 = sld [smem:[#allocation0]]
  $region49: #{tpu_custom_call.1} parent=0
    _
  %s4 = ssub.s32 1, %s2
  %s5 = scalar_select 0, %s4, %s2
  $region1: #{tpu_custom_call.1} parent=0
    #allocation3 [shape = 'u8[8192]{0}', space=vmem, size = 0x2000, scoped, tag = 'input window, operand 0']
    #allocation4 [shape = 's32[2]{0}', space=sflag, size = 0x8, scoped, tag = 'scoped memory for tpu_custom_call.1']
    %6 = vsyncpa [#allocation4], 0
    %s7 = scalar_lea.sflag [#allocation4], 1
    %8 = vsyncpa %s7, 0
    loop: start=0, step=1, limit=4
    $region2: #{tpu_custom_call.1} parent=1 // loop_pre_header
      _
    $region3: #{tpu_custom_call.1} parent=1 // loop_header
      %s10 = sphi 0, %s14
      %p11 = scmp.ge.s32.totalorder %s10, 4
      %s17 = sphi 0, %s29
      %s18 = sphi 0, %s25
      %s19 = sphi 0, %s17
      %s20 = sphi 0, %s18
      %s21 = sphi 0, %s19
      %s22 = sphi 0, %s20
      %s34 = sphi 0, %s36
      %s37 = sphi 0, %s34
      %s38 = sphi 0, %s37
      %s54 = sphi 0, %s38
      %s60 = sphi 0, %s62
      %s63 = sphi 0, %s60
      %s64 = sphi 0, %s63
      %s80 = sphi 0, %s64
    $region4: #{tpu_custom_call.1} parent=1 // loop_header_branch
      %13 = sbr.rel (%p11) target = $region8
    $region5: #{tpu_custom_call.1} parent=1 // loop_body
      %s15 = ssub.s32 %s10, 1
      %s16 = ssub.s32 %s10, 2
      %s23 = sadd.s32 1, %s18
      %p24 = scmp.ge.s32.totalorder %s23, 1
      %s25 = scalar_select %p24, 0, %s23
      %s26 = sadd.s32 1, %s17
      %s27 = scalar_select %p24, %s26, %s17
      %p28 = scmp.ge.s32.totalorder %s27, 2
      %s29 = scalar_select %p28, 0, %s27
      %s30 = ssub.s32 %s17, %s29
      %s31 = ssub.s32 %s18, %s25
      %s32 = sor.u32 %s30, %s31
      %p33 = scmp.eq.s32.totalorder %s32, 0
      %s35 = sadd.s32 %s34, 1
      %s36 = scalar_select %p33, %s34, %s35
      %p39 = pneg %p33
      %p40 = scmp.eq.s32.totalorder %s10, 1
      %p41 = por %p39, %p40
      %p42 = scmp.ne.s32.totalorder %s34, %s37
      %p43 = scmp.eq.s32.totalorder %s10, 0
      %p44 = por %p42, %p43
      %p45 = scmp.ne.s32.totalorder %s34, %s37
      %p46 = scmp.eq.s32.totalorder %s15, 1
      %p47 = por %p45, %p46
      %p48 = scmp.ne.s32.totalorder %s37, %s38
      %p49 = scmp.eq.s32.totalorder %s15, 0
      %p50 = por %p48, %p49
      %p51 = scmp.ne.s32.totalorder %s37, %s38
      %p52 = scmp.eq.s32.totalorder %s16, 1
      %p53 = por %p51, %p52
      %p55 = scmp.ne.s32.totalorder %s38, %s54
      %p56 = scmp.eq.s32.totalorder %s16, 0
      %p57 = por %p55, %p56
      %s58 = ssub.s32 %s17, %s29
      %p59 = scmp.eq.s32.totalorder %s58, 0
      %s61 = sadd.s32 %s60, 1
      %s62 = scalar_select %p59, %s60, %s61
      %p65 = pneg %p59
      %p66 = scmp.eq.s32.totalorder %s10, 1
      %p67 = por %p65, %p66
      %p68 = scmp.ne.s32.totalorder %s60, %s63
      %p69 = scmp.eq.s32.totalorder %s10, 0
      %p70 = por %p68, %p69
      %p71 = scmp.ne.s32.totalorder %s60, %s63
      %p72 = scmp.eq.s32.totalorder %s15, 1
      %p73 = por %p71, %p72
      %p74 = scmp.ne.s32.totalorder %s63, %s64
      %p75 = scmp.eq.s32.totalorder %s15, 0
      %p76 = por %p74, %p75
      %p77 = scmp.ne.s32.totalorder %s63, %s64
      %p78 = scmp.eq.s32.totalorder %s16, 1
      %p79 = por %p77, %p78
      %p81 = scmp.ne.s32.totalorder %s64, %s80
      %p82 = scmp.eq.s32.totalorder %s16, 0
      %p83 = por %p81, %p82
      %p84 = scmp.le.s32.totalorder 1, %s10
      %p85 = scmp.lt.s32.totalorder %s10, 3
      %p86 = pnand %p84, %p85
      %p87 = pneg %p86
      // Predicated region
      $region9: #{tpu_custom_call.1} parent=5 // pred_check
        _
      $region10: #{tpu_custom_call.1} parent=5 // pred_check_branch
        %89 = sbr.rel (%p86) target = $region12
      $region11: #{tpu_custom_call.1} parent=5 // pred_region
        %s90 = ssub.s32 %s10, 1
      $region12: #{tpu_custom_call.1} parent=5 // pred_fallthru
        _
      %p91 = scmp.lt.s32.totalorder %s10, 2
      // Predicated region
      $region13: #{tpu_custom_call.1} parent=5 // pred_check
        %p92 = pneg %p91
      $region14: #{tpu_custom_call.1} parent=5 // pred_check_branch
        %94 = sbr.rel (%p92) target = $region16
      $region15: #{tpu_custom_call.1} parent=5 // pred_region
        // Predicated region
        $region17: #{tpu_custom_call.1} parent=15 // pred_check
          %p95 = pneg %p44
        $region18: #{tpu_custom_call.1} parent=15 // pred_check_branch
          %97 = sbr.rel (%p95) target = $region20
        $region19: #{tpu_custom_call.1} parent=15 // pred_region
          %s98 = sand.u32 %s34, 1
          %s99 = scalar_lea.sflag [#allocation4], %s98
          %s100 = sand.u32 %s34, 1
          %s101 = smul.addr %s100, 8
          %s102 = scalar_lea.vmem [#allocation3], %s101
          %s104 = ssub.s32 128, 128
          %105 = vsyncadd %s99, %s104
          %s106 = sadd.s32 %s18, %s17
          %s107 = smul.addr %s106, 128
          %s108 = scalar_lea.hbm %s0, %s107
          %s110 = sshll.u32 %s102, 4
          %s111 = int_to_ptr.vmem [resolvable:$true] %s110
          %113 = dma.hbm_to_vmem [thread:$0]  %s108, 128, %s111, %s99
        $region20: #{tpu_custom_call.1} parent=15 // pred_fallthru
          _
      $region16: #{tpu_custom_call.1} parent=5 // pred_fallthru
        _
      %p114 = scmp.le.s32.totalorder 1, %s10
      %p115 = scmp.lt.s32.totalorder %s10, 3
      %p116 = pnand %p114, %p115
      %p117 = pneg %p116
      // Predicated region
      $region21: #{tpu_custom_call.1} parent=5 // pred_check
        _
      $region22: #{tpu_custom_call.1} parent=5 // pred_check_branch
        %119 = sbr.rel (%p116) target = $region24
      $region23: #{tpu_custom_call.1} parent=5 // pred_region
        %s120 = ssub.s32 %s10, 1
        %s121 = sand.u32 %s37, 1
        %s122 = scalar_lea.sflag [#allocation4], %s121
        %s123 = sand.u32 %s37, 1
        %s124 = smul.addr %s123, 8
        %s125 = scalar_lea.vmem [#allocation3], %s124
        // Predicated region
        $region25: #{tpu_custom_call.1} parent=23 // pred_check
          %p126 = pneg %p50
        $region26: #{tpu_custom_call.1} parent=23 // pred_check_branch
          %128 = sbr.rel (%p126) target = $region28
        $region27: #{tpu_custom_call.1} parent=23 // pred_region
          %129 = dma.done %s122, 128
        $region28: #{tpu_custom_call.1} parent=23 // pred_fallthru
          _
        %s130 = sand.u32 %s37, 1
        %s131 = scalar_lea.sflag [#allocation4], %s130
        %s132 = sand.u32 %s37, 1
        %s133 = smul.addr %s132, 8
        %s134 = scalar_lea.vmem [#allocation3], %s133
        %p135 = pneg %p50
        %p136 = pneg %p47
        %p137 = pneg %p76
        %p138 = pneg %p73
        %p139 = scmp.lt.s32.totalorder %s19, 1
        %s140 = scalar_select %p139, %s19, 1
        %s141 = smul.addr %s140, 8
        %s142 = scalar_lea.vmem %s1, %s141
        %p143 = scmp.lt.s32.totalorder %s19, 1
        %s144 = scalar_select %p143, %s19, 1
        %s145 = smul.addr %s144, 8
        %s146 = scalar_lea.vmem %s1, %s145
        %p147 = scmp.eq.s32.totalorder %s20, 0
        // Predicated region
        $region29: #{tpu_custom_call.1} parent=23 // pred_check
          %p148 = pneg %p147
        $region30: #{tpu_custom_call.1} parent=23 // pred_check_branch
          %150 = sbr.rel (%p148) target = $region32
        $region31: #{tpu_custom_call.1} parent=23 // pred_region
          %vm151 = vcmask 7168
          %152 = vst.msk [vmem:[#allocation2] sm:$0xff] %vm151, 0.0
        $region32: #{tpu_custom_call.1} parent=23 // pred_fallthru
          _
        %v153 = vld [vmem:[%s125] sm:$0xff]
        %v154 = vld [vmem:[#allocation2] sm:$0xff]
        %v155 = vmul.f32 %v153, %v153
        %156 = vadd.xlane.f32.xlu0 %v155
        %v157 = vpop.xlane.xlu0 %156
        %v158 = vadd.f32 %v154, %v157
        %vm159 = vcmask 7168
        %160 = vst.msk [vmem:[#allocation2] sm:$0xff] %vm159, %v158
        // Predicated region
        $region33: #{tpu_custom_call.1} parent=23 // pred_check
          %p161 = pneg %p147
        $region34: #{tpu_custom_call.1} parent=23 // pred_check_branch
          %163 = sbr.rel (%p161) target = $region36
        $region35: #{tpu_custom_call.1} parent=23 // pred_region
          %v164 = vld [vmem:[#allocation2] sm:$0xff]
          %v165 = vmax.f32 %v164, 1e-16
          %v166 = vrsqrt.pop %v165
          %167 = vst.msk [vmem:[%s146] sm:$0xff] %vm159, %v166
        $region36: #{tpu_custom_call.1} parent=23 // pred_fallthru
          _
        %p168 = scmp.lt.s32.totalorder %s19, 1
        %s169 = scalar_select %p168, %s19, 1
        %s170 = smul.addr %s169, 8
        %s171 = scalar_lea.vmem %s1, %s170
        // Predicated region
        $region37: #{tpu_custom_call.1} parent=23 // pred_check
          %p172 = pneg %p73
        $region38: #{tpu_custom_call.1} parent=23 // pred_check_branch
          %174 = sbr.rel (%p172) target = $region40
        $region39: #{tpu_custom_call.1} parent=23 // pred_region
          _
        $region40: #{tpu_custom_call.1} parent=23 // pred_fallthru
          _
      $region24: #{tpu_custom_call.1} parent=5 // pred_fallthru
        _
      %p175 = scmp.le.s32.totalorder 2, %s10
      // Predicated region
      $region41: #{tpu_custom_call.1} parent=5 // pred_check
        %p176 = pneg %p175
      $region42: #{tpu_custom_call.1} parent=5 // pred_check_branch
        %178 = sbr.rel (%p176) target = $region44
      $region43: #{tpu_custom_call.1} parent=5 // pred_region
        %s179 = ssub.s32 %s10, 2
        // Predicated region
        $region45: #{tpu_custom_call.1} parent=43 // pred_check
          %p180 = pneg %p79
        $region46: #{tpu_custom_call.1} parent=43 // pred_check_branch
          %182 = sbr.rel (%p180) target = $region48
        $region47: #{tpu_custom_call.1} parent=43 // pred_region
          %p183 = scmp.lt.s32.totalorder %s21, 1
          %s184 = scalar_select %p183, %s21, 1
          %s185 = smul.addr %s184, 8
          %s186 = scalar_lea.vmem %s1, %s185
        $region48: #{tpu_custom_call.1} parent=43 // pred_fallthru
          _
      $region44: #{tpu_custom_call.1} parent=5 // pred_fallthru
        _
    $region6: #{tpu_custom_call.1} parent=1 // loop_footer
      %s14 = sadd.s32 1, %s10
    $region7: #{tpu_custom_call.1} parent=1 // loop_footer_branch
      %9 = sbr.rel target = $region3
    $region8: #{tpu_custom_call.1} parent=1 // loop_exit
      _
    %187 = vsyncpa [#allocation4], 1
    %s188 = scalar_lea.sflag [#allocation4], 1
    %189 = vsyncpa %s188, 1

</llo_original>
